<compile_context>
chip_gen: v5e
topology: v5e:2x2
jax: 0.10.0
libtpu: 0.0.40
codegen_flags: <defaults>
</compile_context>

<pallas_src>
import functools

import jax
import jax.numpy as jnp
from jax import lax
from jax.experimental import pallas as pl
from jax.experimental.pallas import tpu as pltpu

_EPS = 1e-6  # F.pairwise_distance default eps (added to the raw difference)


# --------------------------------------------------------------------------------------
# Tile selection
# --------------------------------------------------------------------------------------
def _pick_row_tile(lane_width, itemsize):
    """Budget-based row tile for a (rows, lane_width) layout (rows not yet applied)."""
    pack = max(8, 32 // itemsize)                 # f32 -> 8, bf16 -> 16, int8/fp8 -> 32
    lane_pad = ((lane_width + 127) // 128) * 128  # VMEM lane padding
    per_row = (2 * 2 * lane_pad * itemsize        # 2 input streams x 2 pipeline buffers
               + 2 * 128 * 4                      # label block (pads to 128 lanes) x 2 bufs
               + 4 * lane_pad * 4)                # f32 temporaries (cast/diff/diff^2/...)
    budget = 24 * 1024 * 1024                     # headroom under the 32 MiB scoped VMEM (v7x)
    step_cap = max(pack, (2 * 1024 * 1024) // max(lane_pad * itemsize, 1))  # ~2 MiB/step/input
    return max(pack, min(budget // per_row, step_cap))


def _normalize_tile(tb, nrows, pack):
    if tb >= nrows:
        return nrows                              # single full-extent block (any size is legal)
    return max(pack, (tb // pack) * pack)         # sublane-pack aligned


# --------------------------------------------------------------------------------------
# Kernels
# --------------------------------------------------------------------------------------
def _packed_kernel(a_ref, p_ref, l_ref, out_ref, *, margin, feat, nseg,
                   nrows, row_tile, nb_inner, nb_total):
    """Lane-dense path: blocks are (tb, 128); each packed row holds `nseg` original rows."""
    k = pl.program_id(1)

    @pl.when(k == 0)
    def _():
        out_ref[...] = jnp.zeros_like(out_ref)    # resident accumulator block

    a = a_ref[...].astype(jnp.float32)
    p = p_ref[...].astype(jnp.float32)
    diff = a - p + _EPS                           # (tb, 128), every lane useful
    d2 = diff * diff
    lab = l_ref[...]                              # (tb, nseg), already f32 (wrapper)

    pad = nrows % row_tile != 0
    if pad:                                       # compile-time: only exists if unaligned
        gb = pl.program_id(0) * nb_inner + k
        rows = lax.broadcasted_iota(jnp.int32, (row_tile, 1), 0) + gb * row_tile
        valid = rows < nrows                      # (tb, 1) packed-row validity

    total = jnp.zeros((1, 1), jnp.float32)
    for r in range(nseg):                         # static unroll, nseg = 128 // D <= 8
        sq = jnp.sum(d2[:, r * feat:(r + 1) * feat], axis=-1, keepdims=True)  # (tb, 1)
        lr = lab[:, r:r + 1]
        if pad:
            sq = jnp.where(valid, sq, 0.0)        # padded rows: sq=0, lab=1 -> loss == 0
            lr = jnp.where(valid, lr, 1.0)
        dist = jnp.sqrt(sq)
        hinge = jnp.maximum(margin - dist, 0.0)
        h2 = hinge * hinge
        # 0.5*(lab*sq + (1-lab)*h2) == 0.5*(h2 + lab*(sq - h2)); 0.5 folded into wrapper.
        loss = h2 + lr * (sq - h2)
        total = total + jnp.sum(loss, axis=(0, 1), keepdims=True)

    out_ref[...] += total.reshape(1, 1, 1)


def _rowmajor_kernel(a_ref, p_ref, l_ref, out_ref, *, margin, nrows,
                     row_tile, nb_inner, nb_total):
    """General path: blocks are (tb, D)."""
    k = pl.program_id(1)

    @pl.when(k == 0)
    def _():
        out_ref[...] = jnp.zeros_like(out_ref)

    a = a_ref[...].astype(jnp.float32)
    p = p_ref[...].astype(jnp.float32)
    diff = a - p + _EPS
    sq = jnp.sum(diff * diff, axis=-1, keepdims=True)      # (tb, 1)
    lab = l_ref[...]

    if nrows % row_tile != 0:
        gb = pl.program_id(0) * nb_inner + k
        rows = lax.broadcasted_iota(jnp.int32, (row_tile, 1), 0) + gb * row_tile
        valid = rows < nrows
        sq = jnp.where(valid, sq, 0.0)
        lab = jnp.where(valid, lab, 1.0)

    dist = jnp.sqrt(sq)
    hinge = jnp.maximum(margin - dist, 0.0)
    h2 = hinge * hinge
    loss = h2 + lab * (sq - h2)                             # 0.5 folded into wrapper
    out_ref[...] += jnp.sum(loss, axis=(0, 1), keepdims=True).reshape(1, 1, 1)


# --------------------------------------------------------------------------------------
# Wrapper
# --------------------------------------------------------------------------------------
def contrastive_loss(anchor, positive, label, margin=1.0, *, row_tile=None):
    """Pallas implementation of ContrastiveLoss.forward. Returns a scalar f32."""
    B, D = anchor.shape
    label_f = label.astype(jnp.float32).reshape(B)
    itemsize = jnp.dtype(anchor.dtype).itemsize
    pack = max(8, 32 // itemsize)

    pack_factor = 128 // D if (D < 128 and 128 % D == 0) else 1
    use_packed = 1 < pack_factor <= 8 and B % pack_factor == 0

    if use_packed:
        nrows, cols = (B * D) // 128, 128
        a2 = anchor.reshape(nrows, cols)          # free row-major views of the HBM bytes
        p2 = positive.reshape(nrows, cols)
        l2 = label_f.reshape(nrows, pack_factor)
    else:
        nrows, cols = B, D
        a2, p2 = anchor, positive
        l2 = label_f.reshape(B, 1)

    tb = row_tile if row_tile is not None else _pick_row_tile(cols, itemsize)
    tb = _normalize_tile(tb, nrows, pack)
    nb = pl.cdiv(nrows, tb)
    nc = 2 if (nb >= 2 and nb % 2 == 0) else 1    # megacore split on v7x
    nbk = nb // nc

    def row_map(c, k):
        return (c * nbk + k, 0)

    if use_packed:
        kern = functools.partial(_packed_kernel, margin=float(margin), feat=D,
                                 nseg=pack_factor, nrows=nrows, row_tile=tb,
                                 nb_inner=nbk, nb_total=nb)
    else:
        kern = functools.partial(_rowmajor_kernel, margin=float(margin),
                                 nrows=nrows, row_tile=tb,
                                 nb_inner=nbk, nb_total=nb)

    cost = pl.CostEstimate(
        flops=6 * B * D + 12 * B,
        transcendentals=B,                        # one sqrt per row
        bytes_accessed=2 * B * D * itemsize + 4 * B + 4 * nc,
    )

    partials = pl.pallas_call(
        kern,
        grid=(nc, nbk),
        out_shape=jax.ShapeDtypeStruct((nc, 1, 1), jnp.float32),
        in_specs=[
            pl.BlockSpec((tb, cols), row_map),
            pl.BlockSpec((tb, cols), row_map),
            pl.BlockSpec((tb, l2.shape[1]), row_map),
        ],
        out_specs=pl.BlockSpec((1, 1, 1), lambda c, k: (c, 0, 0)),
        compiler_params=pltpu.CompilerParams(
            dimension_semantics=("parallel", "arbitrary"),
            vmem_limit_bytes=32 * 1024 * 1024,    # v7x-safe scoped VMEM
        ),
        cost_estimate=cost,
    )(a2, p2, l2)

    # Tiny final reduction over <= 2 per-core partials; the 0.5 is folded in here.
    return jnp.sum(partials) / jnp.float32(2 * B)


# --------------------------------------------------------------------------------------
# Pure-JAX reference (mirrors the PyTorch module) + self-test
# --------------------------------------------------------------------------------------
def _reference(anchor, positive, label, margin=1.0):
    a = anchor.astype(jnp.float32)
    p = positive.astype(jnp.float32)
    d = jnp.sqrt(jnp.sum((a - p + _EPS) ** 2, axis=-1, keepdims=True))
    lab = label.astype(jnp.float32).reshape(anchor.shape[0], 1)
    loss = 0.5 * (lab * d ** 2 + (1.0 - lab) * jnp.maximum(margin - d, 0.0) ** 2)
    return jnp.mean(loss)


if __name__ == "__main__":
    key = jax.random.PRNGKey(0)

    def make(case_key, B, D):
        ka, kp, kl = jax.random.split(case_key, 3)
        a = jax.random.normal(ka, (B, D), dtype=jnp.float32)
        p = jax.random.normal(kp, (B, D), dtype=jnp.float32)
        l = jax.random.bernoulli(kl, 0.5, (B, 1)).astype(jnp.float32)
        return a, p, l

    # (B, D, forced row tile) -- exercises: packed single-block, row-major fallback,
    # packed multi-block with megacore split + masked last block, row-major multi-block + mask.
    cases = [
        (8, 32, None),
        (9, 32, None),
        (100, 32, 8),
        (100, 48, 16),
    ]
    keys = jax.random.split(key, len(cases))
    for case_key, (B, D, rt) in zip(keys, cases):
        a, p, l = make(case_key, B, D)
        out = jax.block_until_ready(contrastive_loss(a, p, l, margin=1.0, row_tile=rt))
        ref = jax.block_until_ready(_reference(a, p, l, margin=1.0))
        assert jnp.allclose(out, ref, rtol=1e-5, atol=1e-5), (B, D, rt, out, ref)

    print("KERNEL_OK")
</pallas_src>

<mosaic_0001>
module attributes {stable_mosaic.version = 11 : i64} {
  func.func @_packed_kernel(%arg0: i32, %arg1: i32, %arg2: memref<2x128xf32, #tpu.memory_space<vmem>>, %arg3: memref<2x128xf32, #tpu.memory_space<vmem>>, %arg4: memref<2x4xf32, #tpu.memory_space<vmem>>, %arg5: memref<1x1x1xf32, #tpu.memory_space<vmem>>) attributes {dimension_semantics = [#tpu.dimension_semantics<parallel>, #tpu.dimension_semantics<arbitrary>], iteration_bounds = array<i64: 1, 1>, scalar_prefetch = 0 : i64, scratch_operands = 0 : i64, tpu.core_type = #tpu.core_type<tc>, window_params = [{transform_indices = @transform_0, window_bounds = array<i64: 2, 128>}, {transform_indices = @transform_1, window_bounds = array<i64: 2, 128>}, {transform_indices = @transform_2, window_bounds = array<i64: 2, 4>}, {transform_indices = @transform_3, window_bounds = array<i64: 1, 1, 1>}]} {
    %c0_i32 = arith.constant 0 : i32
    %0 = arith.cmpi eq, %arg1, %c0_i32 : i32
    %1 = arith.extui %0 : i1 to i32
    %c0_i32_0 = arith.constant 0 : i32
    %2 = arith.cmpi ne, %1, %c0_i32_0 : i32
    scf.if %2 {
      %cst_29 = arith.constant 0.000000e+00 : f32
      %91 = vector.broadcast %cst_29 : f32 to vector<1x1x1xf32>
      %c0_30 = arith.constant 0 : index
      %c0_31 = arith.constant 0 : index
      %c0_32 = arith.constant 0 : index
      %92 = vector.load %arg5[%c0_30, %c0_31, %c0_32] : memref<1x1x1xf32, #tpu.memory_space<vmem>>, vector<1x1x1xf32>
      tpu.vector_store %arg5[%c0_30, %c0_31, %c0_32], %91 {strides = array<i32>} : memref<1x1x1xf32, #tpu.memory_space<vmem>>, vector<1x1x1xf32>,
    } else {
    }
    %c0 = arith.constant 0 : index
    %c0_1 = arith.constant 0 : index
    %3 = vector.load %arg2[%c0, %c0_1] : memref<2x128xf32, #tpu.memory_space<vmem>>, vector<2x128xf32>
    %c0_2 = arith.constant 0 : index
    %c0_3 = arith.constant 0 : index
    %4 = vector.load %arg3[%c0_2, %c0_3] : memref<2x128xf32, #tpu.memory_space<vmem>>, vector<2x128xf32>
    %5 = arith.subf %3, %4 : vector<2x128xf32>
    %cst = arith.constant 9.99999997E-7 : f32
    %6 = vector.broadcast %cst : f32 to vector<2x128xf32>
    %7 = arith.addf %5, %6 : vector<2x128xf32>
    %8 = arith.mulf %7, %7 : vector<2x128xf32>
    %c0_4 = arith.constant 0 : index
    %c0_5 = arith.constant 0 : index
    %9 = vector.load %arg4[%c0_4, %c0_5] : memref<2x4xf32, #tpu.memory_space<vmem>>, vector<2x4xf32>
    %cst_6 = arith.constant 0.000000e+00 : f32
    %10 = vector.broadcast %cst_6 : f32 to vector<1x1xf32>
    %11 = vector.extract_strided_slice %8 {offsets = [0, 0], sizes = [2, 32], strides = [1, 1]} : vector<2x128xf32> to vector<2x32xf32>
    %cst_7 = arith.constant dense<0.000000e+00> : vector<2xf32>
    %12 = vector.multi_reduction <add>, %11, %cst_7 [1] : vector<2x32xf32> to vector<2xf32>
    %13 = vector.shape_cast %12 : vector<2xf32> to vector<2x1xf32>
    %14 = vector.extract_strided_slice %9 {offsets = [0, 0], sizes = [2, 1], strides = [1, 1]} : vector<2x4xf32> to vector<2x1xf32>
    %15 = math.sqrt %13 : vector<2x1xf32>
    %cst_8 = arith.constant 1.000000e+00 : f32
    %16 = vector.broadcast %cst_8 : f32 to vector<2x1xf32>
    %17 = arith.subf %16, %15 : vector<2x1xf32>
    %cst_9 = arith.constant 0.000000e+00 : f32
    %18 = vector.broadcast %cst_9 : f32 to vector<2x1xf32>
    %19 = arith.maximumf %17, %18 : vector<2x1xf32>
    %20 = arith.mulf %19, %19 : vector<2x1xf32>
    %21 = arith.subf %13, %20 : vector<2x1xf32>
    %22 = arith.mulf %14, %21 : vector<2x1xf32>
    %23 = arith.addf %20, %22 : vector<2x1xf32>
    %24 = vector.shape_cast %23 : vector<2x1xf32> to vector<1x2x1xf32>
    %cst_10 = arith.constant dense<0.000000e+00> : vector<1xf32>
    %25 = vector.multi_reduction <add>, %24, %cst_10 [1, 2] : vector<1x2x1xf32> to vector<1xf32>
    %26 = vector.shape_cast %25 : vector<1xf32> to vector<1x1x1xf32>
    %27 = vector.extract %26[0, 0, 0] : f32 from vector<1x1x1xf32>
    %28 = vector.broadcast %27 : f32 to vector<1x1xf32>
    %29 = arith.addf %10, %28 : vector<1x1xf32>
    %30 = vector.extract_strided_slice %8 {offsets = [0, 32], sizes = [2, 32], strides = [1, 1]} : vector<2x128xf32> to vector<2x32xf32>
    %cst_11 = arith.constant dense<0.000000e+00> : vector<2xf32>
    %31 = vector.multi_reduction <add>, %30, %cst_11 [1] : vector<2x32xf32> to vector<2xf32>
    %32 = vector.shape_cast %31 : vector<2xf32> to vector<2x1xf32>
    %33 = vector.extract_strided_slice %9 {offsets = [0, 1], sizes = [2, 1], strides = [1, 1]} : vector<2x4xf32> to vector<2x1xf32>
    %34 = math.sqrt %32 : vector<2x1xf32>
    %cst_12 = arith.constant 1.000000e+00 : f32
    %35 = vector.broadcast %cst_12 : f32 to vector<2x1xf32>
    %36 = arith.subf %35, %34 : vector<2x1xf32>
    %cst_13 = arith.constant 0.000000e+00 : f32
    %37 = vector.broadcast %cst_13 : f32 to vector<2x1xf32>
    %38 = arith.maximumf %36, %37 : vector<2x1xf32>
    %39 = arith.mulf %38, %38 : vector<2x1xf32>
    %40 = arith.subf %32, %39 : vector<2x1xf32>
    %41 = arith.mulf %33, %40 : vector<2x1xf32>
    %42 = arith.addf %39, %41 : vector<2x1xf32>
    %43 = vector.shape_cast %42 : vector<2x1xf32> to vector<1x2x1xf32>
    %cst_14 = arith.constant dense<0.000000e+00> : vector<1xf32>
    %44 = vector.multi_reduction <add>, %43, %cst_14 [1, 2] : vector<1x2x1xf32> to vector<1xf32>
    %45 = vector.shape_cast %44 : vector<1xf32> to vector<1x1x1xf32>
    %46 = vector.extract %45[0, 0, 0] : f32 from vector<1x1x1xf32>
    %47 = vector.broadcast %46 : f32 to vector<1x1xf32>
    %48 = arith.addf %29, %47 : vector<1x1xf32>
    %49 = vector.extract_strided_slice %8 {offsets = [0, 64], sizes = [2, 32], strides = [1, 1]} : vector<2x128xf32> to vector<2x32xf32>
    %cst_15 = arith.constant dense<0.000000e+00> : vector<2xf32>
    %50 = vector.multi_reduction <add>, %49, %cst_15 [1] : vector<2x32xf32> to vector<2xf32>
    %51 = vector.shape_cast %50 : vector<2xf32> to vector<2x1xf32>
    %52 = vector.extract_strided_slice %9 {offsets = [0, 2], sizes = [2, 1], strides = [1, 1]} : vector<2x4xf32> to vector<2x1xf32>
    %53 = math.sqrt %51 : vector<2x1xf32>
    %cst_16 = arith.constant 1.000000e+00 : f32
    %54 = vector.broadcast %cst_16 : f32 to vector<2x1xf32>
    %55 = arith.subf %54, %53 : vector<2x1xf32>
    %cst_17 = arith.constant 0.000000e+00 : f32
    %56 = vector.broadcast %cst_17 : f32 to vector<2x1xf32>
    %57 = arith.maximumf %55, %56 : vector<2x1xf32>
    %58 = arith.mulf %57, %57 : vector<2x1xf32>
    %59 = arith.subf %51, %58 : vector<2x1xf32>
    %60 = arith.mulf %52, %59 : vector<2x1xf32>
    %61 = arith.addf %58, %60 : vector<2x1xf32>
    %62 = vector.shape_cast %61 : vector<2x1xf32> to vector<1x2x1xf32>
    %cst_18 = arith.constant dense<0.000000e+00> : vector<1xf32>
    %63 = vector.multi_reduction <add>, %62, %cst_18 [1, 2] : vector<1x2x1xf32> to vector<1xf32>
    %64 = vector.shape_cast %63 : vector<1xf32> to vector<1x1x1xf32>
    %65 = vector.extract %64[0, 0, 0] : f32 from vector<1x1x1xf32>
    %66 = vector.broadcast %65 : f32 to vector<1x1xf32>
    %67 = arith.addf %48, %66 : vector<1x1xf32>
    %68 = vector.extract_strided_slice %8 {offsets = [0, 96], sizes = [2, 32], strides = [1, 1]} : vector<2x128xf32> to vector<2x32xf32>
    %cst_19 = arith.constant dense<0.000000e+00> : vector<2xf32>
    %69 = vector.multi_reduction <add>, %68, %cst_19 [1] : vector<2x32xf32> to vector<2xf32>
    %70 = vector.shape_cast %69 : vector<2xf32> to vector<2x1xf32>
    %71 = vector.extract_strided_slice %9 {offsets = [0, 3], sizes = [2, 1], strides = [1, 1]} : vector<2x4xf32> to vector<2x1xf32>
    %72 = math.sqrt %70 : vector<2x1xf32>
    %cst_20 = arith.constant 1.000000e+00 : f32
    %73 = vector.broadcast %cst_20 : f32 to vector<2x1xf32>
    %74 = arith.subf %73, %72 : vector<2x1xf32>
    %cst_21 = arith.constant 0.000000e+00 : f32
    %75 = vector.broadcast %cst_21 : f32 to vector<2x1xf32>
    %76 = arith.maximumf %74, %75 : vector<2x1xf32>
    %77 = arith.mulf %76, %76 : vector<2x1xf32>
    %78 = arith.subf %70, %77 : vector<2x1xf32>
    %79 = arith.mulf %71, %78 : vector<2x1xf32>
    %80 = arith.addf %77, %79 : vector<2x1xf32>
    %81 = vector.shape_cast %80 : vector<2x1xf32> to vector<1x2x1xf32>
    %cst_22 = arith.constant dense<0.000000e+00> : vector<1xf32>
    %82 = vector.multi_reduction <add>, %81, %cst_22 [1, 2] : vector<1x2x1xf32> to vector<1xf32>
    %83 = vector.shape_cast %82 : vector<1xf32> to vector<1x1x1xf32>
    %84 = vector.extract %83[0, 0, 0] : f32 from vector<1x1x1xf32>
    %85 = vector.broadcast %84 : f32 to vector<1x1xf32>
    %86 = arith.addf %67, %85 : vector<1x1xf32>
    %c0_23 = arith.constant 0 : index
    %c0_24 = arith.constant 0 : index
    %c0_25 = arith.constant 0 : index
    %87 = vector.load %arg5[%c0_23, %c0_24, %c0_25] : memref<1x1x1xf32, #tpu.memory_space<vmem>>, vector<1x1x1xf32>
    %88 = vector.shape_cast %86 : vector<1x1xf32> to vector<1x1x1xf32>
    %89 = arith.addf %87, %88 : vector<1x1x1xf32>
    %c0_26 = arith.constant 0 : index
    %c0_27 = arith.constant 0 : index
    %c0_28 = arith.constant 0 : index
    %90 = vector.load %arg5[%c0_26, %c0_27, %c0_28] : memref<1x1x1xf32, #tpu.memory_space<vmem>>, vector<1x1x1xf32>
    tpu.vector_store %arg5[%c0_26, %c0_27, %c0_28], %89 {strides = array<i32>} : memref<1x1x1xf32, #tpu.memory_space<vmem>>, vector<1x1x1xf32>,
    return
  }
  func.func @transform_0(%arg0: i32, %arg1: i32) -> (i32, i32) {
    %c1_i32 = arith.constant 1 : i32
    %0 = arith.muli %arg0, %c1_i32 : i32
    %1 = arith.addi %0, %arg1 : i32
    %c0_i32 = arith.constant 0 : i32
    %c0_i32_0 = arith.constant 0 : i32
    return %1, %c0_i32 : i32, i32
  }
  func.func @transform_1(%arg0: i32, %arg1: i32) -> (i32, i32) {
    %c1_i32 = arith.constant 1 : i32
    %0 = arith.muli %arg0, %c1_i32 : i32
    %1 = arith.addi %0, %arg1 : i32
    %c0_i32 = arith.constant 0 : i32
    %c0_i32_0 = arith.constant 0 : i32
    return %1, %c0_i32 : i32, i32
  }
  func.func @transform_2(%arg0: i32, %arg1: i32) -> (i32, i32) {
    %c1_i32 = arith.constant 1 : i32
    %0 = arith.muli %arg0, %c1_i32 : i32
    %1 = arith.addi %0, %arg1 : i32
    %c0_i32 = arith.constant 0 : i32
    %c0_i32_0 = arith.constant 0 : i32
    return %1, %c0_i32 : i32, i32
  }
  func.func @transform_3(%arg0: i32, %arg1: i32) -> (i32, i32, i32) {
    %c0_i32 = arith.constant 0 : i32
    %c0_i32_0 = arith.constant 0 : i32
    %c0_i32_1 = arith.constant 0 : i32
    return %arg0, %c0_i32, %c0_i32_0 : i32, i32, i32
  }
}

</mosaic_0001>

<llo_original>
// kernel: tpu_custom_call.1
$region0: #{tpu_custom_call.1}
  #allocation0 [shape = 'u32[]', space=smem, size = 0x4, offset = 0x4, fixed_abs, tag = 'smem constant byte address 0x4 - core index']
  #allocation1 [shape = 'u32[72,128]{1,0:T(1,128)}', space=vmem, size = 0x9000, scoped, tag = 'internal scratch']
  %s0 = inlined_call_operand.hbm [shape: f32[2,128], index: 0, kind: input, shape index: {}]
  %s1 = inlined_call_operand.hbm [shape: f32[2,128], index: 1, kind: input, shape index: {}]
  %s2 = inlined_call_operand.hbm [shape: f32[2,4], index: 2, kind: input, shape index: {}]
  %s3 = inlined_call_operand.hbm [shape: f32[1,1,1], index: 3, kind: output, shape index: {}]
  %s4 = sld [smem:[#allocation0]]
  $region38: #{tpu_custom_call.1} parent=0
    _
  %s6 = ssub.s32 1, %s4
  %s7 = scalar_select 0, %s6, %s4
  $region1: #{tpu_custom_call.1} parent=0
    #allocation2 [shape = 'u8[1024]{0}', space=vmem, size = 0x400, scoped, tag = 'input window, operand 0, single buffered']
    #allocation3 [shape = 's32[1]{0}', space=sflag, size = 0x4, scoped, tag = 'scoped memory for tpu_custom_call.1']
    #allocation4 [shape = 's32[1]{0}', space=sflag, size = 0x4, scoped, tag = 'scoped memory for tpu_custom_call.1']
    #allocation5 [shape = 'u8[1024]{0}', space=vmem, size = 0x400, scoped, tag = 'input window, operand 1, single buffered']
    #allocation6 [shape = 's32[1]{0}', space=sflag, size = 0x4, scoped, tag = 'scoped memory for tpu_custom_call.1']
    #allocation7 [shape = 'u8[1024]{0}', space=vmem, size = 0x400, scoped, tag = 'input window, operand 2, single buffered']
    #allocation8 [shape = 'u8[512]{0}', space=vmem, size = 0x400, scoped, tag = 'output window, operand 0, single buffered']
    %8 = vsyncpa [#allocation3], 0
    %9 = vsyncpa [#allocation6], 0
    %10 = vsyncpa [#allocation4], 0
    // Predicated region
    $region2: #{tpu_custom_call.1} parent=1 // pred_check
      _
    $region3: #{tpu_custom_call.1} parent=1 // pred_check_branch
      %12 = sbr.rel (0) target = $region5
    $region4: #{tpu_custom_call.1} parent=1 // pred_region
      %s13 = sadd.s32 0, 0
      %15 = vsyncadd [#allocation3], 0
      %s16 = smul.addr %s13, 2
      %s17 = scalar_lea.hbm %s0, %s16
      %s19 = sshll.u32 %s17, 4
      %s20 = int_to_ptr.hbm [resolvable:$true] %s19
      %s21 = sshll.u32 [#allocation2], 4
      %s22 = int_to_ptr.vmem [resolvable:$true] %s21
      %24 = dma.hbm_to_vmem [thread:$0]  %s20, 32, %s22, [#allocation3]
    $region5: #{tpu_custom_call.1} parent=1 // pred_fallthru
      _
    // Predicated region
    $region6: #{tpu_custom_call.1} parent=1 // pred_check
      _
    $region7: #{tpu_custom_call.1} parent=1 // pred_check_branch
      %26 = sbr.rel (0) target = $region9
    $region8: #{tpu_custom_call.1} parent=1 // pred_region
      %s27 = sadd.s32 0, 0
      %29 = vsyncadd [#allocation6], 0
      %s30 = smul.addr %s27, 2
      %s31 = scalar_lea.hbm %s1, %s30
      %s33 = sshll.u32 %s31, 4
      %s34 = int_to_ptr.hbm [resolvable:$true] %s33
      %s35 = sshll.u32 [#allocation5], 4
      %s36 = int_to_ptr.vmem [resolvable:$true] %s35
      %38 = dma.hbm_to_vmem [thread:$0]  %s34, 32, %s36, [#allocation6]
    $region9: #{tpu_custom_call.1} parent=1 // pred_fallthru
      _
    // Predicated region
    $region10: #{tpu_custom_call.1} parent=1 // pred_check
      _
    $region11: #{tpu_custom_call.1} parent=1 // pred_check_branch
      %40 = sbr.rel (0) target = $region13
    $region12: #{tpu_custom_call.1} parent=1 // pred_region
      %s41 = sadd.s32 0, 0
      %43 = vsyncadd [#allocation6], 0
      %s44 = smul.addr %s41, 2
      %s45 = scalar_lea.hbm %s2, %s44
      %s47 = sshll.u32 %s45, 4
      %s48 = int_to_ptr.hbm [resolvable:$true] %s47
      %s49 = sshll.u32 [#allocation7], 4
      %s50 = int_to_ptr.vmem [resolvable:$true] %s49
      %52 = dma.hbm_to_vmem [thread:$0]  %s48, 32, %s50, [#allocation6]
    $region13: #{tpu_custom_call.1} parent=1 // pred_fallthru
      _
    // Predicated region
    $region14: #{tpu_custom_call.1} parent=1 // pred_check
      _
    $region15: #{tpu_custom_call.1} parent=1 // pred_check_branch
      %54 = sbr.rel (0) target = $region17
    $region16: #{tpu_custom_call.1} parent=1 // pred_region
      %56 = dma.done [#allocation3], 32
    $region17: #{tpu_custom_call.1} parent=1 // pred_fallthru
      _
    // Predicated region
    $region18: #{tpu_custom_call.1} parent=1 // pred_check
      _
    $region19: #{tpu_custom_call.1} parent=1 // pred_check_branch
      %58 = sbr.rel (0) target = $region21
    $region20: #{tpu_custom_call.1} parent=1 // pred_region
      %60 = dma.done [#allocation6], 32
    $region21: #{tpu_custom_call.1} parent=1 // pred_fallthru
      _
    // Predicated region
    $region22: #{tpu_custom_call.1} parent=1 // pred_check
      _
    $region23: #{tpu_custom_call.1} parent=1 // pred_check_branch
      %62 = sbr.rel (0) target = $region25
    $region24: #{tpu_custom_call.1} parent=1 // pred_region
      %64 = dma.done [#allocation6], 32
    $region25: #{tpu_custom_call.1} parent=1 // pred_fallthru
      _
    %s65 = sadd.s32 0, 0
    %s66 = sadd.s32 0, 0
    %s67 = sadd.s32 0, 0
    %p68 = scmp.eq.s32.totalorder 0, 0
    // Predicated region
    $region26: #{tpu_custom_call.1} parent=1 // pred_check
      %p69 = pneg %p68
    $region27: #{tpu_custom_call.1} parent=1 // pred_check_branch
      %71 = sbr.rel (%p69) target = $region29
    $region28: #{tpu_custom_call.1} parent=1 // pred_region
      %vm72 = vcmask 0
      %73 = vst.msk [vmem:[#allocation8] sm:$0x1] %vm72, 0.0
    $region29: #{tpu_custom_call.1} parent=1 // pred_fallthru
      _
    %v74 = vld [vmem:[#allocation2] sm:$0x3]
    %v75 = vld [vmem:[#allocation5] sm:$0x3]
    %v76 = vsub.f32 %v74, %v75
    %v77 = vadd.f32 %v76, 1e-06
    %v78 = vmul.f32 %v77, %v77
    %v79 = vld [vmem:[#allocation7] sm:$0x3]
    %vm80 = vcmask 254976
    %v81 = vsel %vm80, %v78, 0.0
    %82 = vadd.xlane.f32.xlu0 %v81
    %v83 = vpop.xlane.xlu0 %82
    %v84 = vrsqrt.pop %v83
    %v85 = vmul.f32 %v84, %v83
    %v86 = vmul.f32 %v85, %v84
    %v87 = vmul.f32 0.5, %v86
    %v88 = vsub.f32 1.5, %v87
    %v89 = vmul.f32 %v84, %v88
    %v90 = vmul.f32 %v83, %v89
    %vm91 = vcmp.eq.f32.partialorder %v83, inf
    %v92 = vsel %vm91, %v83, %v90
    %vm93 = vcmp.eq.f32.partialorder %v83, 0.0
    %v94 = vand.u32 %v83, 2147483648
    %v95 = vsel %vm93, %v94, %v92
    %v96 = vsub.f32 1.0, %v95
    %v97 = vmax.f32 %v96, 0.0
    %v98 = vmul.f32 %v97, %v97
    %v99 = vsub.f32 %v83, %v98
    %v100 = vmul.f32 %v79, %v99
    %v101 = vadd.f32 %v98, %v100
    %vm102 = vcmask 1024
    %v103 = vsel %vm102, %v101, 0.0
    %104 = vadd.xlane.f32.xlu0 %v103
    %v105 = vpop.xlane.xlu0 %104
    %v106 = vrot.slane %v105, 4
    %v107 = vadd.f32 %v105, %v106
    %v108 = vrot.slane %v107, 2
    %v109 = vadd.f32 %v107, %v108
    %v110 = vrot.slane %v109, 1
    %v111 = vadd.f32 %v109, %v110
    %s112 = vtos %v111
    %v113 = vstv %s112
    %v114 = vadd.f32 %v113, 0.0
    %116 = vrot.lane.b32.xlu0 %v78, 96
    %v117 = vpop.permute.xlu0 %116
    %v119 = vsel %vm80, %v117, 0.0
    %120 = vadd.xlane.f32.xlu0 %v119
    %v121 = vpop.xlane.xlu0 %120
    %v122 = vrsqrt.pop %v121
    %v123 = vmul.f32 %v122, %v121
    %v124 = vmul.f32 %v123, %v122
    %v125 = vmul.f32 0.5, %v124
    %v126 = vsub.f32 1.5, %v125
    %v127 = vmul.f32 %v122, %v126
    %v128 = vmul.f32 %v121, %v127
    %vm129 = vcmp.eq.f32.partialorder %v121, inf
    %v130 = vsel %vm129, %v121, %v128
    %vm131 = vcmp.eq.f32.partialorder %v121, 0.0
    %v132 = vand.u32 %v121, 2147483648
    %v133 = vsel %vm131, %v132, %v130
    %v134 = vsub.f32 1.0, %v133
    %v135 = vmax.f32 %v134, 0.0
    %v136 = vmul.f32 %v135, %v135
    %v137 = vsub.f32 %v121, %v136
    %v138 = vmul.f32 %v79, %v137
    %v139 = vadd.f32 %v136, %v138
    %141 = vrot.lane.b32.xlu0 %v139, 127
    %v142 = vpop.permute.xlu0 %141
    %v144 = vsel %vm102, %v142, 0.0
    %145 = vadd.xlane.f32.xlu0 %v144
    %v146 = vpop.xlane.xlu0 %145
    %v147 = vrot.slane %v146, 4
    %v148 = vadd.f32 %v146, %v147
    %v149 = vrot.slane %v148, 2
    %v150 = vadd.f32 %v148, %v149
    %v151 = vrot.slane %v150, 1
    %v152 = vadd.f32 %v150, %v151
    %s153 = vtos %v152
    %v154 = vstv %s153
    %v155 = vadd.f32 %v114, %v154
    %156 = vrot.lane.b32.xlu0 %v78, 64
    %v157 = vpop.permute.xlu0 %156
    %v159 = vsel %vm80, %v157, 0.0
    %160 = vadd.xlane.f32.xlu0 %v159
    %v161 = vpop.xlane.xlu0 %160
    %v162 = vrsqrt.pop %v161
    %v163 = vmul.f32 %v162, %v161
    %v164 = vmul.f32 %v163, %v162
    %v165 = vmul.f32 0.5, %v164
    %v166 = vsub.f32 1.5, %v165
    %v167 = vmul.f32 %v162, %v166
    %v168 = vmul.f32 %v161, %v167
    %vm169 = vcmp.eq.f32.partialorder %v161, inf
    %v170 = vsel %vm169, %v161, %v168
    %vm171 = vcmp.eq.f32.partialorder %v161, 0.0
    %v172 = vand.u32 %v161, 2147483648
    %v173 = vsel %vm171, %v172, %v170
    %v174 = vsub.f32 1.0, %v173
    %v175 = vmax.f32 %v174, 0.0
    %v176 = vmul.f32 %v175, %v175
    %v177 = vsub.f32 %v161, %v176
    %v178 = vmul.f32 %v79, %v177
    %v179 = vadd.f32 %v176, %v178
    %181 = vrot.lane.b32.xlu0 %v179, 126
    %v182 = vpop.permute.xlu0 %181
    %v184 = vsel %vm102, %v182, 0.0
    %185 = vadd.xlane.f32.xlu0 %v184
    %v186 = vpop.xlane.xlu0 %185
    %v187 = vrot.slane %v186, 4
    %v188 = vadd.f32 %v186, %v187
    %v189 = vrot.slane %v188, 2
    %v190 = vadd.f32 %v188, %v189
    %v191 = vrot.slane %v190, 1
    %v192 = vadd.f32 %v190, %v191
    %s193 = vtos %v192
    %v194 = vstv %s193
    %v195 = vadd.f32 %v155, %v194
    %196 = vrot.lane.b32.xlu0 %v78, 32
    %v197 = vpop.permute.xlu0 %196
    %v199 = vsel %vm80, %v197, 0.0
    %200 = vadd.xlane.f32.xlu0 %v199
    %v201 = vpop.xlane.xlu0 %200
    %v202 = vrsqrt.pop %v201
    %v203 = vmul.f32 %v202, %v201
    %v204 = vmul.f32 %v203, %v202
    %v205 = vmul.f32 0.5, %v204
    %v206 = vsub.f32 1.5, %v205
    %v207 = vmul.f32 %v202, %v206
    %v208 = vmul.f32 %v201, %v207
    %vm209 = vcmp.eq.f32.partialorder %v201, inf
    %v210 = vsel %vm209, %v201, %v208
    %vm211 = vcmp.eq.f32.partialorder %v201, 0.0
    %v212 = vand.u32 %v201, 2147483648
    %v213 = vsel %vm211, %v212, %v210
    %v214 = vsub.f32 1.0, %v213
    %v215 = vmax.f32 %v214, 0.0
    %v216 = vmul.f32 %v215, %v215
    %v217 = vsub.f32 %v201, %v216
    %v218 = vmul.f32 %v79, %v217
    %v219 = vadd.f32 %v216, %v218
    %221 = vrot.lane.b32.xlu0 %v219, 125
    %v222 = vpop.permute.xlu0 %221
    %v224 = vsel %vm102, %v222, 0.0
    %225 = vadd.xlane.f32.xlu0 %v224
    %v226 = vpop.xlane.xlu0 %225
    %v227 = vrot.slane %v226, 4
    %v228 = vadd.f32 %v226, %v227
    %v229 = vrot.slane %v228, 2
    %v230 = vadd.f32 %v228, %v229
    %v231 = vrot.slane %v230, 1
    %v232 = vadd.f32 %v230, %v231
    %s233 = vtos %v232
    %v234 = vstv %s233
    %v235 = vadd.f32 %v195, %v234
    %v236 = vld [vmem:[#allocation8] sm:$0x1]
    %v237 = vadd.f32 %v236, %v235
    %vm238 = vcmask 0
    %239 = vst.msk [vmem:[#allocation8] sm:$0x1] %vm238, %v237
    // Predicated region
    $region30: #{tpu_custom_call.1} parent=1 // pred_check
      _
    $region31: #{tpu_custom_call.1} parent=1 // pred_check_branch
      %241 = sbr.rel (0) target = $region33
    $region32: #{tpu_custom_call.1} parent=1 // pred_region
      %243 = vsyncadd [#allocation4], 0
      %s245 = sshll.u32 [#allocation8], 4
      %s246 = int_to_ptr.vmem [resolvable:$true] %s245
      %s247 = sshll.u32 %s3, 4
      %s248 = int_to_ptr.hbm [resolvable:$true] %s247
      %250 = dma.vmem_to_hbm [thread:$0]  %s246, 16, %s248, [#allocation4]
    $region33: #{tpu_custom_call.1} parent=1 // pred_fallthru
      _
    // Predicated region
    $region34: #{tpu_custom_call.1} parent=1 // pred_check
      _
    $region35: #{tpu_custom_call.1} parent=1 // pred_check_branch
      %252 = sbr.rel (0) target = $region37
    $region36: #{tpu_custom_call.1} parent=1 // pred_region
      %254 = dma.done [#allocation4], 16
    $region37: #{tpu_custom_call.1} parent=1 // pred_fallthru
      _
    %255 = vsyncpa [#allocation3], 1
    %256 = vsyncpa [#allocation6], 1
    %257 = vsyncpa [#allocation4], 1

</llo_original>
